<compile_context>
chip_gen: v7x
topology: tpu7x:2x2x1
jax: 0.10.0
libtpu: 0.0.40
codegen_flags: <defaults>
</compile_context>

<pallas_src>
import jax
import jax.numpy as jnp
from jax.experimental import pallas as pl
from jax.experimental.pallas import tpu as pltpu

_TILE_B_MAX = 512   # batch rows per grid step (multiple of 8 sublanes, MXU-friendly)
_LANE = 128         # hidden dims padded to lane multiples


def _round_up(x, m):
    return (x + m - 1) // m * m


def _q_mlp_kernel(obs_ref, act_ref, w1o_ref, w1a_ref, b1_ref, w2_ref, b2_ref,
                  w3_ref, b3_ref, out_ref):
    # Layer 1: concat fused as two matmuls; bf16 MXU operands, f32 accumulation.
    obs = obs_ref[...].astype(jnp.bfloat16)
    act = act_ref[...].astype(jnp.bfloat16)
    h1 = jnp.dot(obs, w1o_ref[...], preferred_element_type=jnp.float32)
    h1 = h1 + jnp.dot(act, w1a_ref[...], preferred_element_type=jnp.float32)
    h1 = jnp.maximum(h1 + b1_ref[...], 0.0)                 # bias + ReLU in f32
    # Layer 2.
    h2 = jnp.dot(h1.astype(jnp.bfloat16), w2_ref[...],
                 preferred_element_type=jnp.float32)
    h2 = jnp.maximum(h2 + b2_ref[...], 0.0)
    # Layer 3 (1-wide head): VPU multiply + lane reduce, not an N=1 MXU matmul.
    q = jnp.sum(h2 * w3_ref[...], axis=-1, keepdims=True) + b3_ref[...]
    out_ref[...] = q.astype(out_ref.dtype)


def init_params(key, obs_dim, act_dim, hidden_sizes):
    """nn.Linear-style init (uniform +/- 1/sqrt(fan_in)); w stored as (in, out)."""
    sizes = [obs_dim + act_dim] + list(hidden_sizes) + [1]
    layers = []
    for j in range(len(sizes) - 1):
        key, kw, kb = jax.random.split(key, 3)
        bound = 1.0 / float(sizes[j]) ** 0.5
        w = jax.random.uniform(kw, (sizes[j], sizes[j + 1]), jnp.float32, -bound, bound)
        b = jax.random.uniform(kb, (sizes[j + 1],), jnp.float32, -bound, bound)
        layers.append((w, b))
    return tuple(layers)


def prepare_params(raw_params, obs_dim):
    """One-time param prep (NOT per step): split W1 (fuses the concat), zero-pad
    hidden dims to 128 lanes, cast MXU weights to bf16, keep biases / head in f32."""
    (w1, b1), (w2, b2), (w3, b3) = raw_params
    h1, h2 = w1.shape[1], w2.shape[1]
    H1, H2 = _round_up(h1, _LANE), _round_up(h2, _LANE)

    def pad_to(a, shape):
        return jnp.pad(a, [(0, s - d) for s, d in zip(shape, a.shape)])

    w1o = pad_to(w1[:obs_dim], (obs_dim, H1)).astype(jnp.bfloat16)
    w1a = pad_to(w1[obs_dim:], (w1.shape[0] - obs_dim, H1)).astype(jnp.bfloat16)
    b1p = pad_to(b1.reshape(1, -1), (1, H1)).astype(jnp.float32)
    w2p = pad_to(w2, (H1, H2)).astype(jnp.bfloat16)
    b2p = pad_to(b2.reshape(1, -1), (1, H2)).astype(jnp.float32)
    w3p = pad_to(w3.reshape(1, -1), (1, H2)).astype(jnp.float32)   # used on VPU, keep f32
    b3p = b3.reshape(1, 1).astype(jnp.float32)
    return (w1o, w1a, b1p, w2p, b2p, w3p, b3p)


def mlp_q_function(obs, act, prepared_params):
    """Pallas MLPQFunction.forward: obs (B, obs_dim), act (B, act_dim) -> (B,)."""
    w1o, w1a, b1, w2, b2, w3, b3 = prepared_params
    B, obs_dim = obs.shape
    act_dim = act.shape[1]
    H1, H2 = w1o.shape[1], w2.shape[1]

    tile_b = _TILE_B_MAX if B >= _TILE_B_MAX else _round_up(B, 8)
    B_pad = _round_up(B, tile_b)
    if B_pad != B:
        obs = jnp.pad(obs, ((0, B_pad - B), (0, 0)))
        act = jnp.pad(act, ((0, B_pad - B), (0, 0)))
    num_tiles = B_pad // tile_b

    def row_spec(d):
        return pl.BlockSpec((tile_b, d), lambda i: (i, 0))

    def resident_spec(a):                      # whole array, VMEM-resident across grid
        return pl.BlockSpec(a.shape, lambda i: (0, 0))

    weight_args = (w1o, w1a, b1, w2, b2, w3, b3)
    flops = 2 * B_pad * (obs_dim * H1 + act_dim * H1 + H1 * H2 + H2)
    bytes_accessed = ((obs.size + act.size) * 4 + B_pad * 4
                      + sum(a.size * a.dtype.itemsize for a in weight_args))

    q = pl.pallas_call(
        _q_mlp_kernel,
        out_shape=jax.ShapeDtypeStruct((B_pad, 1), jnp.float32),
        grid=(num_tiles,),
        in_specs=[row_spec(obs_dim), row_spec(act_dim)]
                 + [resident_spec(a) for a in weight_args],
        out_specs=pl.BlockSpec((tile_b, 1), lambda i: (i, 0)),
        compiler_params=pltpu.CompilerParams(
            dimension_semantics=("parallel",)),
        cost_estimate=pl.CostEstimate(
            flops=flops, transcendentals=0, bytes_accessed=bytes_accessed),
    )(obs, act, *weight_args)

    return q[:B, 0]   # matches torch.squeeze(q, -1)


if __name__ == "__main__":
    key = jax.random.PRNGKey(0)
    B, obs_dim, act_dim = 2, 16, 8
    hidden_sizes = (32, 32)

    k_obs, k_act, k_par = jax.random.split(key, 3)
    obs = jax.random.normal(k_obs, (B, obs_dim), jnp.float32)
    act = jax.random.normal(k_act, (B, act_dim), jnp.float32)
    raw_params = init_params(k_par, obs_dim, act_dim, hidden_sizes)
    params = prepare_params(raw_params, obs_dim)

    q = jax.jit(mlp_q_function)(obs, act, params)
    q = jax.block_until_ready(q)

    # Pure-JAX f32 reference on the original (unsplit / unpadded) params.
    x = jnp.concatenate([obs, act], axis=-1)
    (w1, b1), (w2, b2), (w3, b3) = raw_params
    h = jnp.maximum(x @ w1 + b1, 0.0)
    h = jnp.maximum(h @ w2 + b2, 0.0)
    ref = jnp.squeeze(h @ w3 + b3, -1)

    assert q.shape == (B,), q.shape
    # bf16 MXU operands (f32 accumulation) -> relaxed tolerance vs. f32 reference.
    assert jnp.allclose(q, ref, atol=5e-2, rtol=5e-2), (q, ref)
    print("KERNEL_OK")
</pallas_src>

<mosaic_0001>
module attributes {stable_mosaic.version = 11 : i64} {
  func.func @_q_mlp_kernel(%arg0: i32, %arg1: memref<8x16xf32, #tpu.memory_space<vmem>>, %arg2: memref<8x8xf32, #tpu.memory_space<vmem>>, %arg3: memref<16x128xbf16, #tpu.memory_space<vmem>>, %arg4: memref<8x128xbf16, #tpu.memory_space<vmem>>, %arg5: memref<1x128xf32, #tpu.memory_space<vmem>>, %arg6: memref<128x128xbf16, #tpu.memory_space<vmem>>, %arg7: memref<1x128xf32, #tpu.memory_space<vmem>>, %arg8: memref<1x128xf32, #tpu.memory_space<vmem>>, %arg9: memref<1x1xf32, #tpu.memory_space<vmem>>, %arg10: memref<8x1xf32, #tpu.memory_space<vmem>>) attributes {dimension_semantics = [#tpu.dimension_semantics<parallel>], iteration_bounds = array<i64: 1>, scalar_prefetch = 0 : i64, scratch_operands = 0 : i64, tpu.core_type = #tpu.core_type<tc>, window_params = [{transform_indices = @transform_0, window_bounds = array<i64: 8, 16>}, {transform_indices = @transform_1, window_bounds = array<i64: 8, 8>}, {pipeline_mode = #tpu.pipeline_mode<synchronous>, transform_indices = @transform_2, window_bounds = array<i64: 16, 128>}, {pipeline_mode = #tpu.pipeline_mode<synchronous>, transform_indices = @transform_3, window_bounds = array<i64: 8, 128>}, {pipeline_mode = #tpu.pipeline_mode<synchronous>, transform_indices = @transform_4, window_bounds = array<i64: 1, 128>}, {pipeline_mode = #tpu.pipeline_mode<synchronous>, transform_indices = @transform_5, window_bounds = array<i64: 128, 128>}, {pipeline_mode = #tpu.pipeline_mode<synchronous>, transform_indices = @transform_6, window_bounds = array<i64: 1, 128>}, {pipeline_mode = #tpu.pipeline_mode<synchronous>, transform_indices = @transform_7, window_bounds = array<i64: 1, 128>}, {pipeline_mode = #tpu.pipeline_mode<synchronous>, transform_indices = @transform_8, window_bounds = array<i64: 1, 1>}, {transform_indices = @transform_9, window_bounds = array<i64: 8, 1>}]} {
    %c0 = arith.constant 0 : index
    %c0_0 = arith.constant 0 : index
    %0 = vector.load %arg1[%c0, %c0_0] : memref<8x16xf32, #tpu.memory_space<vmem>>, vector<8x16xf32>
    %1 = arith.truncf %0 : vector<8x16xf32> to vector<8x16xbf16>
    %c0_1 = arith.constant 0 : index
    %c0_2 = arith.constant 0 : index
    %2 = vector.load %arg2[%c0_1, %c0_2] : memref<8x8xf32, #tpu.memory_space<vmem>>, vector<8x8xf32>
    %3 = arith.truncf %2 : vector<8x8xf32> to vector<8x8xbf16>
    %c0_3 = arith.constant 0 : index
    %c0_4 = arith.constant 0 : index
    %4 = vector.load %arg3[%c0_3, %c0_4] : memref<16x128xbf16, #tpu.memory_space<vmem>>, vector<16x128xbf16>
    %cst = arith.constant dense<0.000000e+00> : vector<8x128xf32>
    %5 = tpu.matmul %1, %4, %cst {dimension_numbers = #tpu.dot_dimension_numbers<[1], [0], [0], [1], [0, 0, 1, 1], [], []>} : vector<8x16xbf16>, vector<16x128xbf16>, vector<8x128xf32> -> vector<8x128xf32>
    %c0_5 = arith.constant 0 : index
    %c0_6 = arith.constant 0 : index
    %6 = vector.load %arg4[%c0_5, %c0_6] : memref<8x128xbf16, #tpu.memory_space<vmem>>, vector<8x128xbf16>
    %cst_7 = arith.constant dense<0.000000e+00> : vector<8x128xf32>
    %7 = tpu.matmul %3, %6, %cst_7 {dimension_numbers = #tpu.dot_dimension_numbers<[1], [0], [0], [1], [0, 0, 1, 1], [], []>} : vector<8x8xbf16>, vector<8x128xbf16>, vector<8x128xf32> -> vector<8x128xf32>
    %8 = arith.addf %5, %7 : vector<8x128xf32>
    %c0_8 = arith.constant 0 : index
    %c0_9 = arith.constant 0 : index
    %9 = vector.load %arg5[%c0_8, %c0_9] : memref<1x128xf32, #tpu.memory_space<vmem>>, vector<1x128xf32>
    %10 = vector.broadcast %9 : vector<1x128xf32> to vector<8x128xf32>
    %11 = arith.addf %8, %10 : vector<8x128xf32>
    %cst_10 = arith.constant 0.000000e+00 : f32
    %12 = vector.broadcast %cst_10 : f32 to vector<8x128xf32>
    %13 = arith.maximumf %11, %12 : vector<8x128xf32>
    %14 = arith.truncf %13 : vector<8x128xf32> to vector<8x128xbf16>
    %c0_11 = arith.constant 0 : index
    %c0_12 = arith.constant 0 : index
    %15 = vector.load %arg6[%c0_11, %c0_12] : memref<128x128xbf16, #tpu.memory_space<vmem>>, vector<128x128xbf16>
    %cst_13 = arith.constant dense<0.000000e+00> : vector<8x128xf32>
    %16 = tpu.matmul %14, %15, %cst_13 {dimension_numbers = #tpu.dot_dimension_numbers<[1], [0], [0], [1], [0, 0, 1, 1], [], []>} : vector<8x128xbf16>, vector<128x128xbf16>, vector<8x128xf32> -> vector<8x128xf32>
    %c0_14 = arith.constant 0 : index
    %c0_15 = arith.constant 0 : index
    %17 = vector.load %arg7[%c0_14, %c0_15] : memref<1x128xf32, #tpu.memory_space<vmem>>, vector<1x128xf32>
    %18 = vector.broadcast %17 : vector<1x128xf32> to vector<8x128xf32>
    %19 = arith.addf %16, %18 : vector<8x128xf32>
    %cst_16 = arith.constant 0.000000e+00 : f32
    %20 = vector.broadcast %cst_16 : f32 to vector<8x128xf32>
    %21 = arith.maximumf %19, %20 : vector<8x128xf32>
    %c0_17 = arith.constant 0 : index
    %c0_18 = arith.constant 0 : index
    %22 = vector.load %arg8[%c0_17, %c0_18] : memref<1x128xf32, #tpu.memory_space<vmem>>, vector<1x128xf32>
    %23 = vector.broadcast %22 : vector<1x128xf32> to vector<8x128xf32>
    %24 = arith.mulf %21, %23 : vector<8x128xf32>
    %cst_19 = arith.constant dense<0.000000e+00> : vector<8xf32>
    %25 = vector.multi_reduction <add>, %24, %cst_19 [1] : vector<8x128xf32> to vector<8xf32>
    %26 = vector.shape_cast %25 : vector<8xf32> to vector<8x1xf32>
    %c0_20 = arith.constant 0 : index
    %c0_21 = arith.constant 0 : index
    %27 = vector.load %arg9[%c0_20, %c0_21] : memref<1x1xf32, #tpu.memory_space<vmem>>, vector<1x1xf32>
    %28 = vector.broadcast %27 : vector<1x1xf32> to vector<8x1xf32>
    %29 = arith.addf %26, %28 : vector<8x1xf32>
    %c0_22 = arith.constant 0 : index
    %c0_23 = arith.constant 0 : index
    %30 = vector.load %arg10[%c0_22, %c0_23] : memref<8x1xf32, #tpu.memory_space<vmem>>, vector<8x1xf32>
    tpu.vector_store %arg10[%c0_22, %c0_23], %29 {strides = array<i32>} : memref<8x1xf32, #tpu.memory_space<vmem>>, vector<8x1xf32>,
    return
  }
  func.func @transform_0(%arg0: i32) -> (i32, i32) {
    %c0_i32 = arith.constant 0 : i32
    %c0_i32_0 = arith.constant 0 : i32
    return %arg0, %c0_i32 : i32, i32
  }
  func.func @transform_1(%arg0: i32) -> (i32, i32) {
    %c0_i32 = arith.constant 0 : i32
    %c0_i32_0 = arith.constant 0 : i32
    return %arg0, %c0_i32 : i32, i32
  }
  func.func @transform_2(%arg0: i32) -> (i32, i32) {
    %c0_i32 = arith.constant 0 : i32
    %c0_i32_0 = arith.constant 0 : i32
    %c0_i32_1 = arith.constant 0 : i32
    return %c0_i32, %c0_i32_0 : i32, i32
  }
  func.func @transform_3(%arg0: i32) -> (i32, i32) {
    %c0_i32 = arith.constant 0 : i32
    %c0_i32_0 = arith.constant 0 : i32
    %c0_i32_1 = arith.constant 0 : i32
    return %c0_i32, %c0_i32_0 : i32, i32
  }
  func.func @transform_4(%arg0: i32) -> (i32, i32) {
    %c0_i32 = arith.constant 0 : i32
    %c0_i32_0 = arith.constant 0 : i32
    %c0_i32_1 = arith.constant 0 : i32
    return %c0_i32, %c0_i32_0 : i32, i32
  }
  func.func @transform_5(%arg0: i32) -> (i32, i32) {
    %c0_i32 = arith.constant 0 : i32
    %c0_i32_0 = arith.constant 0 : i32
    %c0_i32_1 = arith.constant 0 : i32
    return %c0_i32, %c0_i32_0 : i32, i32
  }
  func.func @transform_6(%arg0: i32) -> (i32, i32) {
    %c0_i32 = arith.constant 0 : i32
    %c0_i32_0 = arith.constant 0 : i32
    %c0_i32_1 = arith.constant 0 : i32
    return %c0_i32, %c0_i32_0 : i32, i32
  }
  func.func @transform_7(%arg0: i32) -> (i32, i32) {
    %c0_i32 = arith.constant 0 : i32
    %c0_i32_0 = arith.constant 0 : i32
    %c0_i32_1 = arith.constant 0 : i32
    return %c0_i32, %c0_i32_0 : i32, i32
  }
  func.func @transform_8(%arg0: i32) -> (i32, i32) {
    %c0_i32 = arith.constant 0 : i32
    %c0_i32_0 = arith.constant 0 : i32
    %c0_i32_1 = arith.constant 0 : i32
    return %c0_i32, %c0_i32_0 : i32, i32
  }
  func.func @transform_9(%arg0: i32) -> (i32, i32) {
    %c0_i32 = arith.constant 0 : i32
    %c0_i32_0 = arith.constant 0 : i32
    return %arg0, %c0_i32 : i32, i32
  }
}

</mosaic_0001>

<llo_original>
// kernel: mlp_q_function.1
$region0: #{mlp_q_function.1}
  #allocation0 [shape = 'u32[]', space=smem, size = 0x4, offset = 0x4, fixed_abs, tag = 'smem constant byte address 0x4 - core index']
  #allocation1 [shape = 'u32[144,128]{1,0:T(1,128)}', space=vmem, size = 0x12000, scoped, tag = 'internal scratch']
  #allocation2 [shape = 'f32[1,1]{1,0:T(1,128)S(1)}', space=vmem, size = 0x200, scoped, tag = 'scoped memory for mlp_q_function.1']
  %s0 = inlined_call_operand.vmem [shape: f32[8,16], index: 0, kind: input, shape index: {}]
  %s1 = inlined_call_operand.vmem [shape: f32[8,8], index: 1, kind: input, shape index: {}]
  %s2 = inlined_call_operand.vmem [shape: bf16[16,128], index: 2, kind: input, shape index: {}]
  %s3 = inlined_call_operand.vmem [shape: bf16[8,128], index: 3, kind: input, shape index: {}]
  %s4 = inlined_call_operand.vmem [shape: f32[1,128], index: 4, kind: input, shape index: {}]
  %s5 = inlined_call_operand.hbm [shape: bf16[128,128], index: 5, kind: input, shape index: {}]
  %s6 = inlined_call_operand.vmem [shape: f32[1,128], index: 6, kind: input, shape index: {}]
  %s7 = inlined_call_operand.vmem [shape: f32[1,128], index: 7, kind: input, shape index: {}]
  %s8 = inlined_call_operand.<no memory space> [shape: f32[1,1], index: 8, kind: input, shape index: {}]
  %s9 = inlined_call_operand.vmem [shape: f32[8,1], index: 9, kind: output, shape index: {}]
  %s10 = sld [smem:[#allocation0]]
  $region50: #{mlp_q_function.1} parent=0
    _
  %s12 = ssub.s32 1, %s10
  %s13 = scalar_select 0, %s12, %s10
  %v14 = vstv %s8
  %15 = vst [vmem:[#allocation2] sm:$0x1] %v14
  $region1: #{mlp_q_function.1} parent=0
    #allocation3 [shape = 'u8[32768]{0}', space=vmem, size = 0x8000, scoped, tag = 'input window, operand 5, single buffered']
    #allocation4 [shape = 's32[1]{0}', space=sflag, size = 0x4, scoped, tag = 'scoped memory for mlp_q_function.1']
    %16 = vsyncpa [#allocation4], 0
    // Predicated region
    $region2: #{mlp_q_function.1} parent=1 // pred_check
      _
    $region3: #{mlp_q_function.1} parent=1 // pred_check_branch
      %18 = sbr.rel (0) target = $region5
    $region4: #{mlp_q_function.1} parent=1 // pred_region
      _
    $region5: #{mlp_q_function.1} parent=1 // pred_fallthru
      _
    // Predicated region
    $region6: #{mlp_q_function.1} parent=1 // pred_check
      _
    $region7: #{mlp_q_function.1} parent=1 // pred_check_branch
      %20 = sbr.rel (0) target = $region9
    $region8: #{mlp_q_function.1} parent=1 // pred_region
      _
    $region9: #{mlp_q_function.1} parent=1 // pred_fallthru
      _
    // Predicated region
    $region10: #{mlp_q_function.1} parent=1 // pred_check
      _
    $region11: #{mlp_q_function.1} parent=1 // pred_check_branch
      %22 = sbr.rel (0) target = $region13
    $region12: #{mlp_q_function.1} parent=1 // pred_region
      _
    $region13: #{mlp_q_function.1} parent=1 // pred_fallthru
      _
    // Predicated region
    $region14: #{mlp_q_function.1} parent=1 // pred_check
      _
    $region15: #{mlp_q_function.1} parent=1 // pred_check_branch
      %24 = sbr.rel (0) target = $region17
    $region16: #{mlp_q_function.1} parent=1 // pred_region
      _
    $region17: #{mlp_q_function.1} parent=1 // pred_fallthru
      _
    // Predicated region
    $region18: #{mlp_q_function.1} parent=1 // pred_check
      _
    $region19: #{mlp_q_function.1} parent=1 // pred_check_branch
      %26 = sbr.rel (0) target = $region21
    $region20: #{mlp_q_function.1} parent=1 // pred_region
      _
    $region21: #{mlp_q_function.1} parent=1 // pred_fallthru
      _
    // Predicated region
    $region22: #{mlp_q_function.1} parent=1 // pred_check
      _
    $region23: #{mlp_q_function.1} parent=1 // pred_check_branch
      %28 = sbr.rel (0) target = $region25
    $region24: #{mlp_q_function.1} parent=1 // pred_region
      %s30 = ssub.s32 1024, 1024
      %31 = vsyncadd [#allocation4], %s30
      %s32 = sshll.u32 [#allocation3], 4
      %s33 = int_to_ptr.vmem [resolvable:$true] %s32
      %38 = dma.hbm_to_vmem [thread:$0]  %s5, 1024, %s33, [#allocation4], 64, 64, 4
    $region25: #{mlp_q_function.1} parent=1 // pred_fallthru
      _
    // Predicated region
    $region26: #{mlp_q_function.1} parent=1 // pred_check
      _
    $region27: #{mlp_q_function.1} parent=1 // pred_check_branch
      %40 = sbr.rel (0) target = $region29
    $region28: #{mlp_q_function.1} parent=1 // pred_region
      _
    $region29: #{mlp_q_function.1} parent=1 // pred_fallthru
      _
    // Predicated region
    $region30: #{mlp_q_function.1} parent=1 // pred_check
      _
    $region31: #{mlp_q_function.1} parent=1 // pred_check_branch
      %42 = sbr.rel (0) target = $region33
    $region32: #{mlp_q_function.1} parent=1 // pred_region
      _
    $region33: #{mlp_q_function.1} parent=1 // pred_fallthru
      _
    // Predicated region
    $region34: #{mlp_q_function.1} parent=1 // pred_check
      _
    $region35: #{mlp_q_function.1} parent=1 // pred_check_branch
      %44 = sbr.rel (0) target = $region37
    $region36: #{mlp_q_function.1} parent=1 // pred_region
      _
    $region37: #{mlp_q_function.1} parent=1 // pred_fallthru
      _
    // Predicated region
    $region38: #{mlp_q_function.1} parent=1 // pred_check
      _
    $region39: #{mlp_q_function.1} parent=1 // pred_check_branch
      %46 = sbr.rel (0) target = $region41
    $region40: #{mlp_q_function.1} parent=1 // pred_region
      %47 = dma.done [#allocation4], 1024
    $region41: #{mlp_q_function.1} parent=1 // pred_fallthru
      _
    %v49 = vld [vmem:[%s0] sm:$0xff]
    %v50 = vpack.c.bf16 %v49, %v49
    %v51 = vld [vmem:[%s1] sm:$0xff]
    %v52 = vpack.c.bf16 %v51, %v51
    %v53 = vld [vmem:[%s2] sm:$0xf]
    %v54 = vld [vmem:[%s2 + $0x4] sm:$0xf]
    %v55 = vld [vmem:[%s3] sm:$0xf]
    %vm56 = vcmask 64512
    %v58 = vsel %vm56, %v52, 0
    %vm60 = vcmask 1043456
    %v62 = vsel %vm60, %v55, 0
    %64 = vmatprep.subr.bf16.mxu0 0
    %65 = vmatpush1.bf16.msra.mxu0 %v62
    %66 = vmatprep.subr.bf16.mxu0 0
    %67 = vmatpush1.bf16.msra.mxu0 0
    %68 = vmatprep.subr.bf16.mxu0 0
    %69 = vmatpush1.bf16.msra.mxu0 0
    %70 = vmatprep.subr.bf16.mxu0 0
    %71 = vmatpush1.bf16.msra.mxu0 0
    %72 = vmatprep.subr.bf16.mxu0 0
    %73 = vmatpush1.bf16.msra.mxu0 0
    %74 = vmatprep.subr.bf16.mxu0 0
    %75 = vmatpush1.bf16.msra.mxu0 0
    %76 = vmatprep.subr.bf16.mxu0 0
    %77 = vmatpush1.bf16.msra.mxu0 0
    %78 = vmatprep.subr.bf16.mxu0 0
    %79 = vmatpush1.bf16.msra.mxu0 0
    %80 = vmatprep.subr.bf16.mxu0 0
    %81 = vmatpush1.bf16.msra.mxu0 0
    %82 = vmatprep.subr.bf16.mxu0 0
    %83 = vmatpush1.bf16.msra.mxu0 0
    %84 = vmatprep.subr.bf16.mxu0 0
    %85 = vmatpush1.bf16.msra.mxu0 0
    %86 = vmatprep.subr.bf16.mxu0 0
    %87 = vmatpush1.bf16.msra.mxu0 0
    %88 = vmatprep.subr.bf16.mxu0 0
    %89 = vmatpush1.bf16.msra.mxu0 0
    %90 = vmatprep.subr.bf16.mxu0 0
    %91 = vmatpush1.bf16.msra.mxu0 0
    %92 = vmatprep.subr.bf16.mxu0 0
    %93 = vmatpush1.bf16.msra.mxu0 0
    %94 = vmatprep.subr.bf16.mxu0 0
    %95 = vmatpush1.bf16.msra.mxu0 0
    %96 = vmatprep.mubr.bf16.mxu0 0
    %97 = vmatmul.mubr.bf16.gmra.mrb[0].mxu0 %v58
    %v98 = vpop.f32.mrb[0].mxu0
    %v99 = vadd.f32 0.0, %v98
    %v100 = vpop.f32.mrb[0].mxu0
    %v101 = vpop.f32.mrb[0].mxu0
    %v102 = vpop.f32.mrb[0].mxu0
    %103 = vdwg.mxu0
    %v106 = vunpack.c.l.b16 %v53
    %v107 = vunpack.c.l.b16 %v54
    %v108 = vpack.c.b16 %v107, %v106
    %vm110 = vcmask 130048
    %v112 = vsel %vm110, %v50, 0
    %114 = vmatprep.subr.bf16.mxu0 0
    %115 = vmatpush1.bf16.msra.mxu0 %v108
    %116 = vmatprep.subr.bf16.mxu0 0
    %117 = vmatpush1.bf16.msra.mxu0 0
    %118 = vmatprep.subr.bf16.mxu0 0
    %119 = vmatpush1.bf16.msra.mxu0 0
    %120 = vmatprep.subr.bf16.mxu0 0
    %121 = vmatpush1.bf16.msra.mxu0 0
    %122 = vmatprep.subr.bf16.mxu0 0
    %123 = vmatpush1.bf16.msra.mxu0 0
    %124 = vmatprep.subr.bf16.mxu0 0
    %125 = vmatpush1.bf16.msra.mxu0 0
    %126 = vmatprep.subr.bf16.mxu0 0
    %127 = vmatpush1.bf16.msra.mxu0 0
    %128 = vmatprep.subr.bf16.mxu0 0
    %129 = vmatpush1.bf16.msra.mxu0 0
    %130 = vmatprep.subr.bf16.mxu0 0
    %131 = vmatpush1.bf16.msra.mxu0 0
    %132 = vmatprep.subr.bf16.mxu0 0
    %133 = vmatpush1.bf16.msra.mxu0 0
    %134 = vmatprep.subr.bf16.mxu0 0
    %135 = vmatpush1.bf16.msra.mxu0 0
    %136 = vmatprep.subr.bf16.mxu0 0
    %137 = vmatpush1.bf16.msra.mxu0 0
    %138 = vmatprep.subr.bf16.mxu0 0
    %139 = vmatpush1.bf16.msra.mxu0 0
    %140 = vmatprep.subr.bf16.mxu0 0
    %141 = vmatpush1.bf16.msra.mxu0 0
    %142 = vmatprep.subr.bf16.mxu0 0
    %143 = vmatpush1.bf16.msra.mxu0 0
    %144 = vmatprep.subr.bf16.mxu0 0
    %145 = vmatpush1.bf16.msra.mxu0 0
    %146 = vmatprep.mubr.bf16.mxu0 0
    %147 = vmatmul.mubr.bf16.gmra.mrb[0].mxu0 %v112
    %v148 = vpop.f32.mrb[0].mxu0
    %v149 = vadd.f32 %v99, %v148
    %v150 = vpop.f32.mrb[0].mxu0
    %v151 = vpop.f32.mrb[0].mxu0
    %v152 = vpop.f32.mrb[0].mxu0
    %153 = vdwg.mxu0
    %v154 = vld [vmem:[%s4] sm:$0x1]
    %v156 = vlaneseq
    %v157 = vshrl.u32 %v156, 7
    %v158 = vsub.s32 0, %v157
    %v159 = vrot.slane %v154, %v158
    %v161 = vadd.f32 %v149, %v159
    %v162 = vmax.f32 %v161, 0.0
    %v163 = vpack.c.bf16 %v162, %v162
    %v164 = vld [vmem:[#allocation3] sm:$0xf]
    %v165 = vld [vmem:[#allocation3 + $0x4] sm:$0xf]
    %v166 = vld [vmem:[#allocation3 + $0x8] sm:$0xf]
    %v167 = vld [vmem:[#allocation3 + $0xc] sm:$0xf]
    %v168 = vld [vmem:[#allocation3 + $0x10] sm:$0xf]
    %v169 = vld [vmem:[#allocation3 + $0x14] sm:$0xf]
    %v170 = vld [vmem:[#allocation3 + $0x18] sm:$0xf]
    %v171 = vld [vmem:[#allocation3 + $0x1c] sm:$0xf]
    %v172 = vld [vmem:[#allocation3 + $0x20] sm:$0xf]
    %v173 = vld [vmem:[#allocation3 + $0x24] sm:$0xf]
    %v174 = vld [vmem:[#allocation3 + $0x28] sm:$0xf]
    %v175 = vld [vmem:[#allocation3 + $0x2c] sm:$0xf]
    %v176 = vld [vmem:[#allocation3 + $0x30] sm:$0xf]
    %v177 = vld [vmem:[#allocation3 + $0x34] sm:$0xf]
    %v178 = vld [vmem:[#allocation3 + $0x38] sm:$0xf]
    %v179 = vld [vmem:[#allocation3 + $0x3c] sm:$0xf]
    %v180 = vld [vmem:[%s6] sm:$0x1]
    %v182 = vlaneseq
    %v183 = vshrl.u32 %v182, 7
    %v184 = vsub.s32 0, %v183
    %v185 = vrot.slane %v180, %v184
    %v203 = vunpack.c.l.b16 %v164
    %v204 = vunpack.c.l.b16 %v165
    %v205 = vunpack.c.l.b16 %v166
    %v206 = vunpack.c.l.b16 %v167
    %v207 = vunpack.c.l.b16 %v168
    %v208 = vunpack.c.l.b16 %v169
    %v209 = vunpack.c.l.b16 %v170
    %v210 = vunpack.c.l.b16 %v171
    %v211 = vunpack.c.l.b16 %v172
    %v212 = vunpack.c.l.b16 %v173
    %v213 = vunpack.c.l.b16 %v174
    %v214 = vunpack.c.l.b16 %v175
    %v215 = vunpack.c.l.b16 %v176
    %v216 = vunpack.c.l.b16 %v177
    %v217 = vunpack.c.l.b16 %v178
    %v218 = vunpack.c.l.b16 %v179
    %v219 = vpack.c.b16 %v204, %v203
    %v220 = vpack.c.b16 %v206, %v205
    %v221 = vpack.c.b16 %v208, %v207
    %v222 = vpack.c.b16 %v210, %v209
    %v223 = vpack.c.b16 %v212, %v211
    %v224 = vpack.c.b16 %v214, %v213
    %v225 = vpack.c.b16 %v216, %v215
    %v226 = vpack.c.b16 %v218, %v217
    %235 = vmatprep.subr.bf16.mxu0 0
    %236 = vmatpush1.bf16.msra.mxu0 %v219
    %237 = vmatprep.subr.bf16.mxu0 0
    %238 = vmatpush1.bf16.msra.mxu0 %v220
    %239 = vmatprep.subr.bf16.mxu0 0
    %240 = vmatpush1.bf16.msra.mxu0 %v221
    %241 = vmatprep.subr.bf16.mxu0 0
    %242 = vmatpush1.bf16.msra.mxu0 %v222
    %243 = vmatprep.subr.bf16.mxu0 0
    %244 = vmatpush1.bf16.msra.mxu0 %v223
    %245 = vmatprep.subr.bf16.mxu0 0
    %246 = vmatpush1.bf16.msra.mxu0 %v224
    %247 = vmatprep.subr.bf16.mxu0 0
    %248 = vmatpush1.bf16.msra.mxu0 %v225
    %249 = vmatprep.subr.bf16.mxu0 0
    %250 = vmatpush1.bf16.msra.mxu0 %v226
    %251 = vmatprep.subr.bf16.mxu0 0
    %252 = vmatpush1.bf16.msra.mxu0 0
    %253 = vmatprep.subr.bf16.mxu0 0
    %254 = vmatpush1.bf16.msra.mxu0 0
    %255 = vmatprep.subr.bf16.mxu0 0
    %256 = vmatpush1.bf16.msra.mxu0 0
    %257 = vmatprep.subr.bf16.mxu0 0
    %258 = vmatpush1.bf16.msra.mxu0 0
    %259 = vmatprep.subr.bf16.mxu0 0
    %260 = vmatpush1.bf16.msra.mxu0 0
    %261 = vmatprep.subr.bf16.mxu0 0
    %262 = vmatpush1.bf16.msra.mxu0 0
    %263 = vmatprep.subr.bf16.mxu0 0
    %264 = vmatpush1.bf16.msra.mxu0 0
    %265 = vmatprep.subr.bf16.mxu0 0
    %266 = vmatpush1.bf16.msra.mxu0 0
    %267 = vmatprep.mubr.bf16.mxu0 0
    %268 = vmatmul.mubr.bf16.gmra.mrb[0].mxu0 %v163
    %v269 = vpop.f32.mrb[0].mxu0
    %v270 = vadd.f32 %v185, %v269
    %v271 = vpop.f32.mrb[0].mxu0
    %v272 = vpop.f32.mrb[0].mxu0
    %v273 = vpop.f32.mrb[0].mxu0
    %274 = vdwg.mxu0
    %v275 = vmax.f32 %v270, 0.0
    %v276 = vld [vmem:[%s7] sm:$0x1]
    %v278 = vlaneseq
    %v279 = vshrl.u32 %v278, 7
    %v280 = vsub.s32 0, %v279
    %v281 = vrot.slane %v276, %v280
    %v283 = vmul.f32 %v275, %v281
    %284 = vadd.xlane.f32.xlu0 %v283
    %v285 = vpop.xlane.xlu0 %284
    %v286 = vld [vmem:[#allocation2] sm:$0x1]
    %v288 = vlaneseq
    %v289 = vshrl.u32 %v288, 7
    %v290 = vsub.s32 0, %v289
    %v291 = vrot.slane %v286, %v290
    %v293 = vadd.f32 %v285, %v291
    %vm294 = vcmask 7168
    %295 = vst.msk [vmem:[%s9] sm:$0xff] %vm294, %v293
    // Predicated region
    $region42: #{mlp_q_function.1} parent=1 // pred_check
      _
    $region43: #{mlp_q_function.1} parent=1 // pred_check_branch
      %297 = sbr.rel (0) target = $region45
    $region44: #{mlp_q_function.1} parent=1 // pred_region
      _
    $region45: #{mlp_q_function.1} parent=1 // pred_fallthru
      _
    // Predicated region
    $region46: #{mlp_q_function.1} parent=1 // pred_check
      _
    $region47: #{mlp_q_function.1} parent=1 // pred_check_branch
      %299 = sbr.rel (0) target = $region49
    $region48: #{mlp_q_function.1} parent=1 // pred_region
      _
    $region49: #{mlp_q_function.1} parent=1 // pred_fallthru
      _
    %300 = vsyncpa [#allocation4], 1

</llo_original>
